<compile_context>
chip_gen: v7x
topology: tpu7x:2x2x1
jax: 0.10.0
libtpu: 0.0.40
codegen_flags: <defaults>
</compile_context>

<pallas_src>
import functools
import math

import jax
import jax.numpy as jnp
from jax.experimental import pallas as pl
from jax.experimental.pallas import tpu as pltpu


def _ba_layernorm_kernel(x_ref, alpha_ref, beta_ref, o_ref, *, epsilon, f_true):
    # x_ref: (TB, F_pad)   alpha_ref/beta_ref: (1, F_pad)   o_ref: (TB, F_pad)
    x = x_ref[...]
    if x.dtype != jnp.float32:
        x = x.astype(jnp.float32)

    inv_f = 1.0 / float(f_true)                       # static; padded lanes are 0
    s1 = jnp.sum(x, axis=1, keepdims=True)            # (TB, 1)
    s2 = jnp.sum(x * x, axis=1, keepdims=True)        # (TB, 1) — independent of s1
    mean = s1 * inv_f
    var = jnp.maximum(s2 * inv_f - mean * mean, 0.0)  # clamp: cancellation guard
    std = jnp.sqrt(var)                               # biased std, as in the module
    inv = pl.reciprocal(std + epsilon, approx=False)  # exact; only TB values

    alpha = alpha_ref[...]
    beta = beta_ref[...]
    if alpha.dtype != jnp.float32:
        alpha = alpha.astype(jnp.float32)
    if beta.dtype != jnp.float32:
        beta = beta.astype(jnp.float32)

    # (1, F) broadcasts against (TB, F); single fused expression, one store.
    o_ref[...] = ((x - mean) * inv * alpha + beta).astype(o_ref.dtype)


_SUBLANE_BY_ITEMSIZE = {4: 8, 2: 16, 1: 32}   # native sublane tile per dtype width


def _vmem_budget():
    """(tile budget bytes, scoped vmem_limit_bytes), per chip generation."""
    try:
        cap = pltpu.get_tpu_info().vmem_capacity_bytes
    except Exception:
        cap = None
    if cap is not None and cap >= (100 << 20):
        # v5e / v6e: 128 MiB physical VMEM -> larger tiles keep the DMA pipe full.
        return 48 << 20, 64 << 20
    # v7x (64 MiB per TC) or unknown: stay within a conservative scoped limit.
    return 24 << 20, 32 << 20


def _choose_batch_tile(B, F_pad, dtype, budget_bytes, *, max_rows=1024):
    """Largest sublane-aligned row tile whose *real* footprint fits the budget,
    capped so the grid has >= 2-4 steps when B is large (pipelining / v7x)."""
    itemsize = jnp.dtype(dtype).itemsize
    sub = _SUBLANE_BY_ITEMSIZE.get(itemsize, 8)

    # Per-row VMEM: 2x double-buffered input + 2x output tiles in the I/O dtype,
    # plus ~3 live f32 compute temporaries (upcast x, xhat, pre-cast result).
    per_row = F_pad * (4 * itemsize + 3 * 4)
    cap = budget_bytes // per_row
    if cap < min(B, sub):
        # TODO(synk): chunked-F two-pass (partial-sum) variant for huge feature dims.
        raise ValueError(
            f"BaLayerNorm: feature width {F_pad} too large for the "
            f"{budget_bytes}-byte VMEM budget even at a {min(B, sub)}-row tile."
        )

    if B <= sub:
        return B                       # tiny batch: one block == full batch dim

    # Aim for >= 4 grid steps (>= 2 for v7x megacore) while keeping tiles large.
    target = max(B // 4, sub)
    target = -(-target // sub) * sub   # round UP to the sublane multiple
    tb = min(cap, max_rows, target)
    tb = max((tb // sub) * sub, sub)   # round DOWN to the sublane multiple
    if tb >= B:
        return B                       # block dim == full array dim: always legal
    return tb


def ba_layer_norm(x, alpha, beta, *, epsilon=1e-5, learnable=True):
    """x: (B, ...) array; alpha/beta: shape (1, prod(x.shape[1:]))."""
    orig_shape = x.shape
    B = x.shape[0]
    F = math.prod(x.shape[1:])
    x2 = x.reshape(B, F)

    if not learnable:
        # non-learnable path: affine skipped in forward -> identity affine
        alpha = jnp.ones((1, F), x2.dtype)
        beta = jnp.zeros((1, F), x2.dtype)
    alpha = alpha.reshape(1, F).astype(x2.dtype)
    beta = beta.reshape(1, F).astype(x2.dtype)

    # Lane-dense feature axis: pad to a multiple of 128.  Zero padding does not
    # perturb s1/s2; the true F is divided out in the kernel.
    F_pad = max(((F + 127) // 128) * 128, 128)
    if F_pad != F:
        pad = ((0, 0), (0, F_pad - F))
        x2 = jnp.pad(x2, pad)
        alpha = jnp.pad(alpha, pad)
        beta = jnp.pad(beta, pad)

    budget_bytes, vmem_limit = _vmem_budget()
    tb = _choose_batch_tile(B, F_pad, x2.dtype, budget_bytes)
    grid = (pl.cdiv(B, tb),)

    itemsize = jnp.dtype(x2.dtype).itemsize
    kernel = functools.partial(_ba_layernorm_kernel, epsilon=epsilon, f_true=F)

    cost = pl.CostEstimate(
        flops=8 * B * F_pad,
        transcendentals=2 * B,                       # sqrt + reciprocal per row
        bytes_accessed=2 * B * F_pad * itemsize + 2 * F_pad * itemsize,
    )

    out = pl.pallas_call(
        kernel,
        out_shape=jax.ShapeDtypeStruct((B, F_pad), x2.dtype),
        grid=grid,
        in_specs=[
            # If profiling shows exposed DMA at small tb (huge-F regime), add
            # pipeline_mode=pl.Buffered(3) here and re-account the budget.
            pl.BlockSpec((tb, F_pad), lambda i: (i, 0)),   # batch-tiled input
            pl.BlockSpec((1, F_pad), lambda i: (0, 0)),    # alpha: VMEM-resident
            pl.BlockSpec((1, F_pad), lambda i: (0, 0)),    # beta:  VMEM-resident
        ],
        out_specs=pl.BlockSpec((tb, F_pad), lambda i: (i, 0)),
        compiler_params=pltpu.CompilerParams(
            dimension_semantics=("parallel",),   # independent rows -> megacore/2-TC
            vmem_limit_bytes=vmem_limit,
        ),
        cost_estimate=cost,
    )(x2, alpha, beta)

    if F_pad != F:
        out = out[:, :F]
    return out.reshape(orig_shape)


def _reference(x, alpha, beta, epsilon=1e-5, learnable=True):
    size = x.shape
    x2 = x.reshape(x.shape[0], -1).astype(jnp.float32)
    mean = jnp.mean(x2, axis=1, keepdims=True)
    center = x2 - mean
    std = jnp.sqrt(jnp.mean(jnp.square(center), axis=1, keepdims=True))
    out = center / (std + epsilon)
    if learnable:
        out = alpha * out + beta
    return out.reshape(size).astype(x.dtype)


if __name__ == "__main__":
    key = jax.random.PRNGKey(0)
    kx, ka, kb, kx2, ka2, kb2 = jax.random.split(key, 6)

    # ---- case 1: F a multiple of 128 (B=2, C=4, H=16, W=16 -> F=1024) ----
    B, C, H, W = 2, 4, 16, 16
    F1 = C * H * W
    x = jax.random.normal(kx, (B, C, H, W), dtype=jnp.float32)
    # NOTE: the original __init__ fills alpha/beta with 0 (degenerate output);
    # initialize them randomly here so the affine path is actually exercised.
    alpha = jax.random.normal(ka, (1, F1), dtype=jnp.float32) * 0.1 + 1.0
    beta = jax.random.normal(kb, (1, F1), dtype=jnp.float32) * 0.1

    out = jax.block_until_ready(ba_layer_norm(x, alpha, beta, epsilon=1e-5))
    ref = _reference(x, alpha, beta, epsilon=1e-5)
    assert out.shape == x.shape
    assert jnp.allclose(out, ref, atol=1e-3, rtol=1e-3), "case-1 mismatch vs reference"

    # ---- case 2: F NOT a multiple of 128 + multi-step grid (B=16, F=105) ----
    B2, C2, H2, W2 = 16, 3, 5, 7
    F2 = C2 * H2 * W2
    x2 = jax.random.normal(kx2, (B2, C2, H2, W2), dtype=jnp.float32)
    alpha2 = jax.random.normal(ka2, (1, F2), dtype=jnp.float32) * 0.1 + 1.0
    beta2 = jax.random.normal(kb2, (1, F2), dtype=jnp.float32) * 0.1

    out2 = jax.block_until_ready(ba_layer_norm(x2, alpha2, beta2, epsilon=1e-5))
    ref2 = _reference(x2, alpha2, beta2, epsilon=1e-5)
    assert out2.shape == x2.shape
    assert jnp.allclose(out2, ref2, atol=1e-3, rtol=1e-3), "case-2 mismatch vs reference"

    print("KERNEL_OK")
</pallas_src>

<mosaic_0001>
module attributes {stable_mosaic.version = 11 : i64} {
  func.func @_ba_layernorm_kernel(%arg0: i32, %arg1: memref<2x1024xf32, #tpu.memory_space<vmem>>, %arg2: memref<1x1024xf32, #tpu.memory_space<vmem>>, %arg3: memref<1x1024xf32, #tpu.memory_space<vmem>>, %arg4: memref<2x1024xf32, #tpu.memory_space<vmem>>) attributes {dimension_semantics = [#tpu.dimension_semantics<parallel>], iteration_bounds = array<i64: 1>, scalar_prefetch = 0 : i64, scratch_operands = 0 : i64, tpu.core_type = #tpu.core_type<tc>, window_params = [{transform_indices = @transform_0, window_bounds = array<i64: 2, 1024>}, {pipeline_mode = #tpu.pipeline_mode<synchronous>, transform_indices = @transform_1, window_bounds = array<i64: 1, 1024>}, {pipeline_mode = #tpu.pipeline_mode<synchronous>, transform_indices = @transform_2, window_bounds = array<i64: 1, 1024>}, {transform_indices = @transform_3, window_bounds = array<i64: 2, 1024>}]} {
    %c0 = arith.constant 0 : index
    %c0_0 = arith.constant 0 : index
    %0 = vector.load %arg1[%c0, %c0_0] : memref<2x1024xf32, #tpu.memory_space<vmem>>, vector<2x1024xf32>
    %cst = arith.constant dense<0.000000e+00> : vector<2xf32>
    %1 = vector.multi_reduction <add>, %0, %cst [1] : vector<2x1024xf32> to vector<2xf32>
    %2 = vector.shape_cast %1 : vector<2xf32> to vector<2x1xf32>
    %3 = arith.mulf %0, %0 : vector<2x1024xf32>
    %cst_1 = arith.constant dense<0.000000e+00> : vector<2xf32>
    %4 = vector.multi_reduction <add>, %3, %cst_1 [1] : vector<2x1024xf32> to vector<2xf32>
    %5 = vector.shape_cast %4 : vector<2xf32> to vector<2x1xf32>
    %cst_2 = arith.constant 9.765625E-4 : f32
    %6 = vector.broadcast %cst_2 : f32 to vector<2x1xf32>
    %7 = arith.mulf %2, %6 : vector<2x1xf32>
    %cst_3 = arith.constant 9.765625E-4 : f32
    %8 = vector.broadcast %cst_3 : f32 to vector<2x1xf32>
    %9 = arith.mulf %5, %8 : vector<2x1xf32>
    %10 = arith.mulf %7, %7 : vector<2x1xf32>
    %11 = arith.subf %9, %10 : vector<2x1xf32>
    %cst_4 = arith.constant 0.000000e+00 : f32
    %12 = vector.broadcast %cst_4 : f32 to vector<2x1xf32>
    %13 = arith.maximumf %11, %12 : vector<2x1xf32>
    %14 = math.sqrt %13 : vector<2x1xf32>
    %cst_5 = arith.constant 9.99999974E-6 : f32
    %15 = vector.broadcast %cst_5 : f32 to vector<2x1xf32>
    %16 = arith.addf %14, %15 : vector<2x1xf32>
    %17 = tpu.reciprocal %16 : vector<2x1xf32> -> vector<2x1xf32>
    %c0_6 = arith.constant 0 : index
    %c0_7 = arith.constant 0 : index
    %18 = vector.load %arg2[%c0_6, %c0_7] : memref<1x1024xf32, #tpu.memory_space<vmem>>, vector<1x1024xf32>
    %c0_8 = arith.constant 0 : index
    %c0_9 = arith.constant 0 : index
    %19 = vector.load %arg3[%c0_8, %c0_9] : memref<1x1024xf32, #tpu.memory_space<vmem>>, vector<1x1024xf32>
    %20 = vector.broadcast %7 : vector<2x1xf32> to vector<2x1024xf32>
    %21 = arith.subf %0, %20 : vector<2x1024xf32>
    %22 = vector.broadcast %17 : vector<2x1xf32> to vector<2x1024xf32>
    %23 = arith.mulf %21, %22 : vector<2x1024xf32>
    %24 = vector.broadcast %18 : vector<1x1024xf32> to vector<2x1024xf32>
    %25 = arith.mulf %23, %24 : vector<2x1024xf32>
    %26 = vector.broadcast %19 : vector<1x1024xf32> to vector<2x1024xf32>
    %27 = arith.addf %25, %26 : vector<2x1024xf32>
    %c0_10 = arith.constant 0 : index
    %c0_11 = arith.constant 0 : index
    %28 = vector.load %arg4[%c0_10, %c0_11] : memref<2x1024xf32, #tpu.memory_space<vmem>>, vector<2x1024xf32>
    tpu.vector_store %arg4[%c0_10, %c0_11], %27 {strides = array<i32>} : memref<2x1024xf32, #tpu.memory_space<vmem>>, vector<2x1024xf32>,
    return
  }
  func.func @transform_0(%arg0: i32) -> (i32, i32) {
    %c0_i32 = arith.constant 0 : i32
    %c0_i32_0 = arith.constant 0 : i32
    return %arg0, %c0_i32 : i32, i32
  }
  func.func @transform_1(%arg0: i32) -> (i32, i32) {
    %c0_i32 = arith.constant 0 : i32
    %c0_i32_0 = arith.constant 0 : i32
    %c0_i32_1 = arith.constant 0 : i32
    return %c0_i32, %c0_i32_0 : i32, i32
  }
  func.func @transform_2(%arg0: i32) -> (i32, i32) {
    %c0_i32 = arith.constant 0 : i32
    %c0_i32_0 = arith.constant 0 : i32
    %c0_i32_1 = arith.constant 0 : i32
    return %c0_i32, %c0_i32_0 : i32, i32
  }
  func.func @transform_3(%arg0: i32) -> (i32, i32) {
    %c0_i32 = arith.constant 0 : i32
    %c0_i32_0 = arith.constant 0 : i32
    return %arg0, %c0_i32 : i32, i32
  }
}

</mosaic_0001>

<llo_original>
// kernel: tpu_custom_call.1
$region0: #{tpu_custom_call.1}
  #allocation0 [shape = 'u32[]', space=smem, size = 0x4, offset = 0x4, fixed_abs, tag = 'smem constant byte address 0x4 - core index']
  #allocation1 [shape = 'u32[144,128]{1,0:T(1,128)}', space=vmem, size = 0x12000, scoped, tag = 'internal scratch']
  %s0 = inlined_call_operand.hbm [shape: f32[2,1024], index: 0, kind: input, shape index: {}]
  %s1 = inlined_call_operand.hbm [shape: f32[1,1024], index: 1, kind: input, shape index: {}]
  %s2 = inlined_call_operand.hbm [shape: f32[1,1024], index: 2, kind: input, shape index: {}]
  %s3 = inlined_call_operand.hbm [shape: f32[2,1024], index: 3, kind: output, shape index: {}]
  %s4 = sld [smem:[#allocation0]]
  $region34: #{tpu_custom_call.1} parent=0
    _
  %s6 = ssub.s32 1, %s4
  %s7 = scalar_select 0, %s6, %s4
  $region1: #{tpu_custom_call.1} parent=0
    #allocation2 [shape = 'u8[8192]{0}', space=vmem, size = 0x2000, scoped, tag = 'input window, operand 0, single buffered']
    #allocation3 [shape = 's32[1]{0}', space=sflag, size = 0x4, scoped, tag = 'scoped memory for tpu_custom_call.1']
    #allocation4 [shape = 's32[1]{0}', space=sflag, size = 0x4, scoped, tag = 'scoped memory for tpu_custom_call.1']
    #allocation5 [shape = 'u8[4096]{0}', space=vmem, size = 0x1000, scoped, tag = 'input window, operand 1, single buffered']
    #allocation6 [shape = 's32[1]{0}', space=sflag, size = 0x4, scoped, tag = 'scoped memory for tpu_custom_call.1']
    #allocation7 [shape = 'u8[4096]{0}', space=vmem, size = 0x1000, scoped, tag = 'input window, operand 2, single buffered']
    #allocation8 [shape = 'u8[8192]{0}', space=vmem, size = 0x2000, scoped, tag = 'output window, operand 0, single buffered']
    %8 = vsyncpa [#allocation3], 0
    %9 = vsyncpa [#allocation6], 0
    %10 = vsyncpa [#allocation4], 0
    // Predicated region
    $region2: #{tpu_custom_call.1} parent=1 // pred_check
      _
    $region3: #{tpu_custom_call.1} parent=1 // pred_check_branch
      %12 = sbr.rel (0) target = $region5
    $region4: #{tpu_custom_call.1} parent=1 // pred_region
      %s14 = ssub.s32 256, 256
      %15 = vsyncadd [#allocation3], %s14
      %s17 = sshll.u32 [#allocation2], 4
      %s18 = int_to_ptr.vmem [resolvable:$true] %s17
      %20 = dma.hbm_to_vmem [thread:$0]  %s0, 256, %s18, [#allocation3]
    $region5: #{tpu_custom_call.1} parent=1 // pred_fallthru
      _
    // Predicated region
    $region6: #{tpu_custom_call.1} parent=1 // pred_check
      _
    $region7: #{tpu_custom_call.1} parent=1 // pred_check_branch
      %22 = sbr.rel (0) target = $region9
    $region8: #{tpu_custom_call.1} parent=1 // pred_region
      %s24 = ssub.s32 128, 128
      %25 = vsyncadd [#allocation6], %s24
      %s27 = sshll.u32 [#allocation5], 4
      %s28 = int_to_ptr.vmem [resolvable:$true] %s27
      %30 = dma.hbm_to_vmem [thread:$0]  %s1, 128, %s28, [#allocation6]
    $region9: #{tpu_custom_call.1} parent=1 // pred_fallthru
      _
    // Predicated region
    $region10: #{tpu_custom_call.1} parent=1 // pred_check
      _
    $region11: #{tpu_custom_call.1} parent=1 // pred_check_branch
      %32 = sbr.rel (0) target = $region13
    $region12: #{tpu_custom_call.1} parent=1 // pred_region
      %s34 = ssub.s32 128, 128
      %35 = vsyncadd [#allocation6], %s34
      %s37 = sshll.u32 [#allocation7], 4
      %s38 = int_to_ptr.vmem [resolvable:$true] %s37
      %40 = dma.hbm_to_vmem [thread:$0]  %s2, 128, %s38, [#allocation6]
    $region13: #{tpu_custom_call.1} parent=1 // pred_fallthru
      _
    // Predicated region
    $region14: #{tpu_custom_call.1} parent=1 // pred_check
      _
    $region15: #{tpu_custom_call.1} parent=1 // pred_check_branch
      %42 = sbr.rel (0) target = $region17
    $region16: #{tpu_custom_call.1} parent=1 // pred_region
      %43 = dma.done [#allocation3], 256
    $region17: #{tpu_custom_call.1} parent=1 // pred_fallthru
      _
    // Predicated region
    $region18: #{tpu_custom_call.1} parent=1 // pred_check
      _
    $region19: #{tpu_custom_call.1} parent=1 // pred_check_branch
      %45 = sbr.rel (0) target = $region21
    $region20: #{tpu_custom_call.1} parent=1 // pred_region
      %46 = dma.done [#allocation6], 128
    $region21: #{tpu_custom_call.1} parent=1 // pred_fallthru
      _
    // Predicated region
    $region22: #{tpu_custom_call.1} parent=1 // pred_check
      _
    $region23: #{tpu_custom_call.1} parent=1 // pred_check_branch
      %48 = sbr.rel (0) target = $region25
    $region24: #{tpu_custom_call.1} parent=1 // pred_region
      %49 = dma.done [#allocation6], 128
    $region25: #{tpu_custom_call.1} parent=1 // pred_fallthru
      _
    %v50 = vld [vmem:[#allocation2] sm:$0xff]
    %v51 = vld [vmem:[#allocation2 + $0x8] sm:$0xff]
    %v54 = vcombine.high %v50, %v50
    %v56 = vunpack.c.l.s4 1983009808
    %v57 = vunpack.c.0.s8 %v56
    %v58 = vlaneseq
    %v59 = vshrl.u32 %v58, 7
    %v60 = vsub.s32 %v57, %v59
    %v61 = vrot.slane %v50, %v60
    %v63 = vunpack.c.l.s4 1983009808
    %v64 = vunpack.c.0.s8 %v63
    %v65 = vlaneseq
    %v66 = vshrl.u32 %v65, 7
    %v67 = vsub.s32 %v64, %v66
    %v68 = vrot.slane %v54, %v67
    %v69 = vcombine.high %v61, %v61
    %v70 = vcombine.high %v68, %v68
    %v71 = vcombine.high %v51, %v51
    %v73 = vunpack.c.l.s4 1983009808
    %v74 = vunpack.c.0.s8 %v73
    %v75 = vlaneseq
    %v76 = vshrl.u32 %v75, 7
    %v77 = vsub.s32 %v74, %v76
    %v78 = vrot.slane %v51, %v77
    %v80 = vunpack.c.l.s4 1983009808
    %v81 = vunpack.c.0.s8 %v80
    %v82 = vlaneseq
    %v83 = vshrl.u32 %v82, 7
    %v84 = vsub.s32 %v81, %v83
    %v85 = vrot.slane %v71, %v84
    %v86 = vcombine.high %v78, %v78
    %v87 = vcombine.high %v85, %v85
    %vm96 = vcmask 1041408
    %v97 = vsel %vm96, %v61, 0.0
    %v98 = vsel %vm96, %v69, 0.0
    %v99 = vadd.f32 %v97, %v98
    %v100 = vsel %vm96, %v68, 0.0
    %v101 = vadd.f32 %v99, %v100
    %v102 = vsel %vm96, %v70, 0.0
    %v103 = vadd.f32 %v101, %v102
    %v104 = vsel %vm96, %v78, 0.0
    %v105 = vadd.f32 %v103, %v104
    %v106 = vsel %vm96, %v86, 0.0
    %v107 = vadd.f32 %v105, %v106
    %v108 = vsel %vm96, %v85, 0.0
    %v109 = vadd.f32 %v107, %v108
    %v110 = vsel %vm96, %v87, 0.0
    %v111 = vadd.f32 %v109, %v110
    %112 = vadd.xlane.f32.xlu0 %v111
    %v113 = vpop.xlane.xlu0 %112
    %v114 = vmul.f32 %v50, %v50
    %v115 = vmul.f32 %v51, %v51
    %v118 = vcombine.high %v114, %v114
    %v120 = vunpack.c.l.s4 1983009808
    %v121 = vunpack.c.0.s8 %v120
    %v122 = vlaneseq
    %v123 = vshrl.u32 %v122, 7
    %v124 = vsub.s32 %v121, %v123
    %v125 = vrot.slane %v114, %v124
    %v127 = vunpack.c.l.s4 1983009808
    %v128 = vunpack.c.0.s8 %v127
    %v129 = vlaneseq
    %v130 = vshrl.u32 %v129, 7
    %v131 = vsub.s32 %v128, %v130
    %v132 = vrot.slane %v118, %v131
    %v133 = vcombine.high %v125, %v125
    %v134 = vcombine.high %v132, %v132
    %v135 = vcombine.high %v115, %v115
    %v137 = vunpack.c.l.s4 1983009808
    %v138 = vunpack.c.0.s8 %v137
    %v139 = vlaneseq
    %v140 = vshrl.u32 %v139, 7
    %v141 = vsub.s32 %v138, %v140
    %v142 = vrot.slane %v115, %v141
    %v144 = vunpack.c.l.s4 1983009808
    %v145 = vunpack.c.0.s8 %v144
    %v146 = vlaneseq
    %v147 = vshrl.u32 %v146, 7
    %v148 = vsub.s32 %v145, %v147
    %v149 = vrot.slane %v135, %v148
    %v150 = vcombine.high %v142, %v142
    %v151 = vcombine.high %v149, %v149
    %v160 = vsel %vm96, %v125, 0.0
    %v161 = vsel %vm96, %v133, 0.0
    %v162 = vadd.f32 %v160, %v161
    %v163 = vsel %vm96, %v132, 0.0
    %v164 = vadd.f32 %v162, %v163
    %v165 = vsel %vm96, %v134, 0.0
    %v166 = vadd.f32 %v164, %v165
    %v167 = vsel %vm96, %v142, 0.0
    %v168 = vadd.f32 %v166, %v167
    %v169 = vsel %vm96, %v150, 0.0
    %v170 = vadd.f32 %v168, %v169
    %v171 = vsel %vm96, %v149, 0.0
    %v172 = vadd.f32 %v170, %v171
    %v173 = vsel %vm96, %v151, 0.0
    %v174 = vadd.f32 %v172, %v173
    %175 = vadd.xlane.f32.xlu0 %v174
    %v176 = vpop.xlane.xlu0 %175
    %v177 = vmul.f32 %v113, 0.0009765625
    %v178 = vmul.f32 %v176, 0.0009765625
    %v179 = vmul.f32 %v177, %v177
    %v180 = vsub.f32 %v178, %v179
    %v181 = vmax.f32 %v180, 0.0
    %v182 = vrsqrt.pop %v181
    %v183 = vmul.f32 %v181, %v182
    %vm184 = vcmp.eq.f32.partialorder %v181, inf
    %v185 = vsel %vm184, %v181, %v183
    %vm186 = vcmp.eq.f32.partialorder %v181, 0.0
    %v187 = vand.u32 %v181, 2147483648
    %v188 = vsel %vm186, %v187, %v185
    %v189 = vadd.f32 %v188, 1e-05
    %v190 = vrcp.pop %v189
    %v191 = vld [vmem:[#allocation5] sm:$0xff]
    %v192 = vld [vmem:[#allocation7] sm:$0xff]
    %v195 = vunpack.c.l.s4 269488144
    %v196 = vunpack.c.0.s8 %v195
    %v197 = vlaneseq
    %v198 = vshrl.u32 %v197, 7
    %v199 = vsub.s32 %v196, %v198
    %v200 = vrot.slane %v177, %v199
    %v202 = vsub.f32 %v50, %v200
    %v203 = vsub.f32 %v51, %v200
    %v206 = vunpack.c.l.s4 269488144
    %v207 = vunpack.c.0.s8 %v206
    %v208 = vlaneseq
    %v209 = vshrl.u32 %v208, 7
    %v210 = vsub.s32 %v207, %v209
    %v211 = vrot.slane %v190, %v210
    %v213 = vmul.f32 %v202, %v211
    %v214 = vmul.f32 %v203, %v211
    %v216 = vlaneseq
    %v217 = vshrl.u32 %v216, 7
    %v218 = vsub.s32 0, %v217
    %v219 = vrot.slane %v191, %v218
    %v220 = vlaneseq
    %v221 = vshrl.u32 %v220, 7
    %v222 = vsub.s32 1, %v221
    %v223 = vrot.slane %v191, %v222
    %v224 = vlaneseq
    %v225 = vshrl.u32 %v224, 7
    %v226 = vsub.s32 2, %v225
    %v227 = vrot.slane %v191, %v226
    %v228 = vlaneseq
    %v229 = vshrl.u32 %v228, 7
    %v230 = vsub.s32 3, %v229
    %v231 = vrot.slane %v191, %v230
    %v232 = vlaneseq
    %v233 = vshrl.u32 %v232, 7
    %v234 = vsub.s32 4, %v233
    %v235 = vrot.slane %v191, %v234
    %v236 = vlaneseq
    %v237 = vshrl.u32 %v236, 7
    %v238 = vsub.s32 5, %v237
    %v239 = vrot.slane %v191, %v238
    %v240 = vlaneseq
    %v241 = vshrl.u32 %v240, 7
    %v242 = vsub.s32 6, %v241
    %v243 = vrot.slane %v191, %v242
    %v244 = vlaneseq
    %v245 = vshrl.u32 %v244, 7
    %v246 = vsub.s32 7, %v245
    %v247 = vrot.slane %v191, %v246
    %v248 = vcombine.low %v219, %v223
    %v249 = vcombine.low %v227, %v231
    %v251 = vunpack.c.l.s4 1983009808
    %v252 = vunpack.c.0.s8 %v251
    %v253 = vlaneseq
    %v254 = vshrl.u32 %v253, 7
    %v255 = vsub.s32 %v252, %v254
    %v256 = vrot.slane %v248, %v255
    %v258 = vunpack.c.l.s4 1983009808
    %v259 = vunpack.c.0.s8 %v258
    %v260 = vlaneseq
    %v261 = vshrl.u32 %v260, 7
    %v262 = vsub.s32 %v259, %v261
    %v263 = vrot.slane %v249, %v262
    %v264 = vcombine.low %v256, %v263
    %v265 = vcombine.low %v235, %v239
    %v266 = vcombine.low %v243, %v247
    %v268 = vunpack.c.l.s4 1983009808
    %v269 = vunpack.c.0.s8 %v268
    %v270 = vlaneseq
    %v271 = vshrl.u32 %v270, 7
    %v272 = vsub.s32 %v269, %v271
    %v273 = vrot.slane %v265, %v272
    %v275 = vunpack.c.l.s4 1983009808
    %v276 = vunpack.c.0.s8 %v275
    %v277 = vlaneseq
    %v278 = vshrl.u32 %v277, 7
    %v279 = vsub.s32 %v276, %v278
    %v280 = vrot.slane %v266, %v279
    %v281 = vcombine.low %v273, %v280
    %v284 = vmul.f32 %v213, %v264
    %v285 = vmul.f32 %v214, %v281
    %v287 = vlaneseq
    %v288 = vshrl.u32 %v287, 7
    %v289 = vsub.s32 0, %v288
    %v290 = vrot.slane %v192, %v289
    %v291 = vlaneseq
    %v292 = vshrl.u32 %v291, 7
    %v293 = vsub.s32 1, %v292
    %v294 = vrot.slane %v192, %v293
    %v295 = vlaneseq
    %v296 = vshrl.u32 %v295, 7
    %v297 = vsub.s32 2, %v296
    %v298 = vrot.slane %v192, %v297
    %v299 = vlaneseq
    %v300 = vshrl.u32 %v299, 7
    %v301 = vsub.s32 3, %v300
    %v302 = vrot.slane %v192, %v301
    %v303 = vlaneseq
    %v304 = vshrl.u32 %v303, 7
    %v305 = vsub.s32 4, %v304
    %v306 = vrot.slane %v192, %v305
    %v307 = vlaneseq
    %v308 = vshrl.u32 %v307, 7
    %v309 = vsub.s32 5, %v308
    %v310 = vrot.slane %v192, %v309
    %v311 = vlaneseq
    %v312 = vshrl.u32 %v311, 7
    %v313 = vsub.s32 6, %v312
    %v314 = vrot.slane %v192, %v313
    %v315 = vlaneseq
    %v316 = vshrl.u32 %v315, 7
    %v317 = vsub.s32 7, %v316
    %v318 = vrot.slane %v192, %v317
    %v319 = vcombine.low %v290, %v294
    %v320 = vcombine.low %v298, %v302
    %v322 = vunpack.c.l.s4 1983009808
    %v323 = vunpack.c.0.s8 %v322
    %v324 = vlaneseq
    %v325 = vshrl.u32 %v324, 7
    %v326 = vsub.s32 %v323, %v325
    %v327 = vrot.slane %v319, %v326
    %v329 = vunpack.c.l.s4 1983009808
    %v330 = vunpack.c.0.s8 %v329
    %v331 = vlaneseq
    %v332 = vshrl.u32 %v331, 7
    %v333 = vsub.s32 %v330, %v332
    %v334 = vrot.slane %v320, %v333
    %v335 = vcombine.low %v327, %v334
    %v336 = vcombine.low %v306, %v310
    %v337 = vcombine.low %v314, %v318
    %v339 = vunpack.c.l.s4 1983009808
    %v340 = vunpack.c.0.s8 %v339
    %v341 = vlaneseq
    %v342 = vshrl.u32 %v341, 7
    %v343 = vsub.s32 %v340, %v342
    %v344 = vrot.slane %v336, %v343
    %v346 = vunpack.c.l.s4 1983009808
    %v347 = vunpack.c.0.s8 %v346
    %v348 = vlaneseq
    %v349 = vshrl.u32 %v348, 7
    %v350 = vsub.s32 %v347, %v349
    %v351 = vrot.slane %v337, %v350
    %v352 = vcombine.low %v344, %v351
    %v355 = vadd.f32 %v284, %v335
    %v356 = vadd.f32 %v285, %v352
    %357 = vst [vmem:[#allocation8] sm:$0xff] %v355
    %358 = vst [vmem:[#allocation8 + $0x8] sm:$0xff] %v356
    // Predicated region
    $region26: #{tpu_custom_call.1} parent=1 // pred_check
      _
    $region27: #{tpu_custom_call.1} parent=1 // pred_check_branch
      %360 = sbr.rel (0) target = $region29
    $region28: #{tpu_custom_call.1} parent=1 // pred_region
      %s362 = ssub.s32 256, 256
      %363 = vsyncadd [#allocation4], %s362
      %s365 = sshll.u32 [#allocation8], 4
      %s366 = int_to_ptr.vmem [resolvable:$true] %s365
      %368 = dma.vmem_to_hbm [thread:$0]  %s366, 256, %s3, [#allocation4]
    $region29: #{tpu_custom_call.1} parent=1 // pred_fallthru
      _
    // Predicated region
    $region30: #{tpu_custom_call.1} parent=1 // pred_check
      _
    $region31: #{tpu_custom_call.1} parent=1 // pred_check_branch
      %370 = sbr.rel (0) target = $region33
    $region32: #{tpu_custom_call.1} parent=1 // pred_region
      %371 = dma.done [#allocation4], 256
    $region33: #{tpu_custom_call.1} parent=1 // pred_fallthru
      _
    %372 = vsyncpa [#allocation3], 1
    %373 = vsyncpa [#allocation6], 1
    %374 = vsyncpa [#allocation4], 1

</llo_original>
